<compile_context>
chip_gen: v5e
topology: v5e:2x2
jax: 0.10.0
libtpu: 0.0.40
codegen_flags: <defaults>
</compile_context>

<pallas_src>
import functools

import jax
import jax.numpy as jnp
from jax.experimental import pallas as pl
from jax.experimental.pallas import tpu as pltpu


def _lsce_kernel(x_ref, t_ref, out_ref, *, w_target, w_base, inv_n,
                 rows_in_last, needs_mask):
    x_native = x_ref[...]                                        # (TILE_N, C) in dtype
    t = t_ref[...]                                               # (TILE_N, 1) int32

    # Row max in the native dtype (max is exact), then one f32 upcast.
    m = jnp.max(x_native, axis=-1, keepdims=True).astype(jnp.float32)
    x = x_native.astype(jnp.float32)

    # Numerically-stable logsumexp per row.
    lse = m + jnp.log(jnp.sum(jnp.exp(x - m), axis=-1, keepdims=True))

    # Fused weighted reduction:
    #   per_row = confidence*(lse - x[t]) + smoothing*(lse - mean(x))
    #           = lse - sum(w * x),  w = (s/C) + confidence * onehot(target)
    col = jax.lax.broadcasted_iota(jnp.int32, x.shape, 1)        # (TILE_N, C)
    w = jnp.where(col == t, w_target, w_base)
    weighted = jnp.sum(w * x, axis=-1, keepdims=True)            # (TILE_N, 1)
    per_row = lse - weighted

    if needs_mask:
        last = pl.num_programs(0) - 1

        @pl.when(pl.program_id(0) != last)
        def _():
            out_ref[0, 0] = jnp.sum(per_row) * inv_n

        @pl.when(pl.program_id(0) == last)
        def _():
            r = jax.lax.broadcasted_iota(jnp.int32, per_row.shape, 0)
            masked = jnp.where(r < rows_in_last, per_row, 0.0)
            out_ref[0, 0] = jnp.sum(masked) * inv_n
    else:
        out_ref[0, 0] = jnp.sum(per_row) * inv_n


def _round_up(v, m):
    return ((v + m - 1) // m) * m


def _vmem_capacity_bytes():
    try:
        return int(pltpu.get_tpu_info().vmem_capacity_bytes)
    except Exception:
        return 64 << 20   # conservative (v7x-sized) default


def _pick_tile_n(n, c, itemsize, vmem_limit_bytes, block_budget_bytes):
    """Rows per block, sized from real VMEM / HBM-traffic budgets."""
    c_pad = _round_up(c, 128)                       # lane padding
    align = 8 * max(1, 4 // itemsize)               # 8 f32, 16 bf16, 32 int8/fp8
    # Per-row VMEM: 2 double-buffered input blocks (input dtype, lane-padded)
    # plus ~3 live full-tile f32 temporaries (upcast x, exp(x-m), w*x).
    vmem_per_row = 2 * c_pad * itemsize + 3 * c_pad * 4
    max_rows_vmem = max(align, int(vmem_limit_bytes * 0.7) // vmem_per_row)
    # HBM-traffic target per block (amortize ~0.35 us per grid step).
    rows_budget = max(align, block_budget_bytes // (c_pad * itemsize))
    tile = min(n, max_rows_vmem, rows_budget)
    if tile < n:
        tile = max(align, (tile // align) * align)  # sublane-packing aligned
    return tile, align


def _make_even_blocks(n, tile, align):
    """Nudge tile so the block count is even (balances v7x's two TCs)."""
    nb = pl.cdiv(n, tile)
    if nb == 1:
        if n >= 4 * align:                          # big enough to split in two
            half = _round_up(pl.cdiv(n, 2), align)
            if align <= half < n:
                return half
        return tile
    if nb % 2 == 1:
        cand = _round_up(pl.cdiv(n, nb + 1), align)
        if cand >= align and pl.cdiv(n, cand) % 2 == 0:
            return cand
    return tile


def label_smoothing_cross_entropy(x, target, smoothing=0.1, tile_n=None):
    """Pallas equivalent of LabelSmoothingCrossEntropy.forward.

    Args:
      x: (N, C) float logits (f32 or bf16).
      target: (N,) integer class indices.
      smoothing: label smoothing factor (< 1.0).
      tile_n: optional batch-tile override.

    Returns:
      scalar float32 loss.
    """
    assert smoothing < 1.0
    confidence = 1.0 - smoothing
    n, c = x.shape
    itemsize = jnp.dtype(x.dtype).itemsize

    # Generation-aware budgets (v5e/v6e: 128 MiB VMEM, v7x: 64 MiB per TC).
    cap = _vmem_capacity_bytes()
    if cap >= (96 << 20):
        vmem_limit = 64 << 20
        block_budget = 16 << 20
    else:
        vmem_limit = 40 << 20
        block_budget = 4 << 20

    if tile_n is None:
        tile_n, align = _pick_tile_n(n, c, itemsize, vmem_limit, block_budget)
        tile_n = _make_even_blocks(n, tile_n, align)
    tile_n = int(tile_n)

    num_blocks = pl.cdiv(n, tile_n)
    needs_mask = (n % tile_n) != 0
    rows_in_last = n - (num_blocks - 1) * tile_n
    target_2d = target.reshape(n, 1).astype(jnp.int32)

    kernel = functools.partial(
        _lsce_kernel,
        w_target=float(confidence) + float(smoothing) / float(c),
        w_base=float(smoothing) / float(c),
        inv_n=1.0 / float(n),
        rows_in_last=int(rows_in_last),
        needs_mask=bool(needs_mask),
    )

    partials = pl.pallas_call(
        kernel,
        out_shape=jax.ShapeDtypeStruct((num_blocks, 1), jnp.float32),
        grid=(num_blocks,),
        in_specs=[
            pl.BlockSpec((tile_n, c), lambda i: (i, 0)),   # logits block (VMEM)
            pl.BlockSpec((tile_n, 1), lambda i: (i, 0)),   # targets block (VMEM)
        ],
        out_specs=pl.BlockSpec((1, 1), lambda i: (i, 0),
                               memory_space=pltpu.SMEM),   # per-block partial
        compiler_params=pltpu.CompilerParams(
            dimension_semantics=("parallel",),
            vmem_limit_bytes=vmem_limit,
        ),
    )(x, target_2d)

    # Tiny reduction over per-block partials (already scaled by 1/N).
    return jnp.sum(partials)


def _reference(x, target, smoothing=0.1):
    confidence = 1.0 - smoothing
    logprobs = jax.nn.log_softmax(x.astype(jnp.float32), axis=-1)
    nll = -jnp.take_along_axis(
        logprobs, target[:, None].astype(jnp.int32), axis=-1)[:, 0]
    smooth = -jnp.mean(logprobs, axis=-1)
    return jnp.mean(confidence * nll + smoothing * smooth)


if __name__ == "__main__":
    key = jax.random.PRNGKey(0)
    kx, kt = jax.random.split(key)

    # Case 1: single-block path (batch=8, classes=32), f32.
    N, C = 8, 32
    x = jax.random.normal(kx, (N, C), dtype=jnp.float32)
    target = jax.random.randint(kt, (N,), 0, C, dtype=jnp.int32)
    loss = jax.block_until_ready(label_smoothing_cross_entropy(x, target, 0.1))
    ref = _reference(x, target, 0.1)
    assert jnp.allclose(loss, ref, rtol=1e-5, atol=1e-5), (loss, ref)

    # Case 2: multi-block grid with a ragged last block (N=20, tile_n=8), f32.
    N2, C2 = 20, 32
    kx2, kt2 = jax.random.split(kt)
    x2 = jax.random.normal(kx2, (N2, C2), dtype=jnp.float32)
    t2 = jax.random.randint(kt2, (N2,), 0, C2, dtype=jnp.int32)
    loss2 = jax.block_until_ready(
        label_smoothing_cross_entropy(x2, t2, 0.1, tile_n=8))
    ref2 = _reference(x2, t2, 0.1)
    assert jnp.allclose(loss2, ref2, rtol=1e-5, atol=1e-5), (loss2, ref2)

    # Case 3: bf16 logits (auto tile, exercises the native-dtype max path).
    N3, C3 = 64, 128
    kx3, kt3 = jax.random.split(kt2)
    x3 = jax.random.normal(kx3, (N3, C3), dtype=jnp.float32).astype(jnp.bfloat16)
    t3 = jax.random.randint(kt3, (N3,), 0, C3, dtype=jnp.int32)
    loss3 = jax.block_until_ready(label_smoothing_cross_entropy(x3, t3, 0.1))
    ref3 = _reference(x3, t3, 0.1)
    assert jnp.allclose(loss3, ref3, rtol=2e-3, atol=2e-3), (loss3, ref3)

    print("KERNEL_OK")
</pallas_src>

<mosaic_0001>
module attributes {stable_mosaic.version = 11 : i64} {
  func.func @_lsce_kernel(%arg0: i32, %arg1: memref<8x32xf32, #tpu.memory_space<vmem>>, %arg2: memref<8x1xi32, #tpu.memory_space<vmem>>, %arg3: memref<1x1xf32, #tpu.memory_space<smem>>) attributes {dimension_semantics = [#tpu.dimension_semantics<parallel>], iteration_bounds = array<i64: 1>, scalar_prefetch = 0 : i64, scratch_operands = 0 : i64, tpu.core_type = #tpu.core_type<tc>, window_params = [{transform_indices = @transform_0, window_bounds = array<i64: 8, 32>}, {transform_indices = @transform_1, window_bounds = array<i64: 8, 1>}, {transform_indices = @transform_2, window_bounds = array<i64: 1, 1>}]} {
    %c0 = arith.constant 0 : index
    %c0_0 = arith.constant 0 : index
    %0 = vector.load %arg1[%c0, %c0_0] : memref<8x32xf32, #tpu.memory_space<vmem>>, vector<8x32xf32>
    %c0_1 = arith.constant 0 : index
    %c0_2 = arith.constant 0 : index
    %1 = vector.load %arg2[%c0_1, %c0_2] : memref<8x1xi32, #tpu.memory_space<vmem>>, vector<8x1xi32>
    %cst = arith.constant dense<0xFF800000> : vector<8xf32>
    %2 = vector.multi_reduction <maximumf>, %0, %cst [1] : vector<8x32xf32> to vector<8xf32>
    %3 = vector.shape_cast %2 : vector<8xf32> to vector<8x1xf32>
    %4 = vector.broadcast %3 : vector<8x1xf32> to vector<8x32xf32>
    %5 = arith.subf %0, %4 : vector<8x32xf32>
    %6 = math.exp %5 : vector<8x32xf32>
    %cst_3 = arith.constant dense<0.000000e+00> : vector<8xf32>
    %7 = vector.multi_reduction <add>, %6, %cst_3 [1] : vector<8x32xf32> to vector<8xf32>
    %8 = vector.shape_cast %7 : vector<8xf32> to vector<8x1xf32>
    %9 = math.log %8 : vector<8x1xf32>
    %10 = arith.addf %3, %9 : vector<8x1xf32>
    %11 = tpu.iota {dimensions = array<i32: 1>} : vector<8x32xi32>
    %12 = vector.broadcast %1 : vector<8x1xi32> to vector<8x32xi32>
    %13 = arith.cmpi eq, %11, %12 : vector<8x32xi32>
    %cst_4 = arith.constant 0.903124988 : f32
    %cst_5 = arith.constant 3.125000e-03 : f32
    %14 = vector.broadcast %cst_4 : f32 to vector<8x32xf32>
    %15 = vector.broadcast %cst_5 : f32 to vector<8x32xf32>
    %16 = arith.select %13, %14, %15 : vector<8x32xi1>, vector<8x32xf32>
    %17 = arith.mulf %16, %0 : vector<8x32xf32>
    %cst_6 = arith.constant dense<0.000000e+00> : vector<8xf32>
    %18 = vector.multi_reduction <add>, %17, %cst_6 [1] : vector<8x32xf32> to vector<8xf32>
    %19 = vector.shape_cast %18 : vector<8xf32> to vector<8x1xf32>
    %20 = arith.subf %10, %19 : vector<8x1xf32>
    %21 = vector.shape_cast %20 : vector<8x1xf32> to vector<1x8x1xf32>
    %cst_7 = arith.constant dense<0.000000e+00> : vector<1xf32>
    %22 = vector.multi_reduction <add>, %21, %cst_7 [1, 2] : vector<1x8x1xf32> to vector<1xf32>
    %23 = vector.shape_cast %22 : vector<1xf32> to vector<1x1x1xf32>
    %24 = vector.extract %23[0, 0, 0] : f32 from vector<1x1x1xf32>
    %cst_8 = arith.constant 1.250000e-01 : f32
    %25 = arith.mulf %24, %cst_8 : f32
    %c0_9 = arith.constant 0 : index
    %c0_10 = arith.constant 0 : index
    %26 = memref.load %arg3[%c0_9, %c0_10] : memref<1x1xf32, #tpu.memory_space<smem>>
    memref.store %25, %arg3[%c0_9, %c0_10] : memref<1x1xf32, #tpu.memory_space<smem>>
    return
  }
  func.func @transform_0(%arg0: i32) -> (i32, i32) {
    %c0_i32 = arith.constant 0 : i32
    %c0_i32_0 = arith.constant 0 : i32
    return %arg0, %c0_i32 : i32, i32
  }
  func.func @transform_1(%arg0: i32) -> (i32, i32) {
    %c0_i32 = arith.constant 0 : i32
    %c0_i32_0 = arith.constant 0 : i32
    return %arg0, %c0_i32 : i32, i32
  }
  func.func @transform_2(%arg0: i32) -> (i32, i32) {
    %c0_i32 = arith.constant 0 : i32
    %c0_i32_0 = arith.constant 0 : i32
    return %arg0, %c0_i32 : i32, i32
  }
}

</mosaic_0001>

<llo_original>
// kernel: tpu_custom_call.1
$region0: #{tpu_custom_call.1}
  #allocation0 [shape = 'u32[]', space=smem, size = 0x4, offset = 0x4, fixed_abs, tag = 'smem constant byte address 0x4 - core index']
  #allocation1 [shape = 'u32[72,128]{1,0:T(1,128)}', space=vmem, size = 0x9000, scoped, tag = 'internal scratch']
  %s0 = inlined_call_operand.vmem [shape: f32[8,32], index: 0, kind: input, shape index: {}]
  %s1 = inlined_call_operand.vmem [shape: s32[8,1], index: 1, kind: input, shape index: {}]
  %s2 = inlined_call_operand.hbm [shape: f32[1,1], index: 2, kind: output, shape index: {}]
  %s3 = sld [smem:[#allocation0]]
  $region18: #{tpu_custom_call.1} parent=0
    _
  %s5 = ssub.s32 1, %s3
  %s6 = scalar_select 0, %s5, %s3
  $region1: #{tpu_custom_call.1} parent=0
    #allocation2 [shape = 'u8[512]{0}', space=smem, size = 0x200, scoped, tag = 'output window, operand 0, single buffered']
    #allocation3 [shape = 's32[1]{0}', space=sflag, size = 0x4, scoped, tag = 'scoped memory for tpu_custom_call.1']
    %7 = vsyncpa [#allocation3], 0
    // Predicated region
    $region2: #{tpu_custom_call.1} parent=1 // pred_check
      _
    $region3: #{tpu_custom_call.1} parent=1 // pred_check_branch
      %9 = sbr.rel (0) target = $region5
    $region4: #{tpu_custom_call.1} parent=1 // pred_region
      _
    $region5: #{tpu_custom_call.1} parent=1 // pred_fallthru
      _
    // Predicated region
    $region6: #{tpu_custom_call.1} parent=1 // pred_check
      _
    $region7: #{tpu_custom_call.1} parent=1 // pred_check_branch
      %11 = sbr.rel (0) target = $region9
    $region8: #{tpu_custom_call.1} parent=1 // pred_region
      _
    $region9: #{tpu_custom_call.1} parent=1 // pred_fallthru
      _
    %v12 = vld [vmem:[%s0] sm:$0xff]
    %v13 = vld [vmem:[%s1] sm:$0xff]
    %vm14 = vcmask 261120
    %v15 = vsel %vm14, %v12, -inf
    %16 = vmax.xlane.f32.xlu0 %v15
    %v17 = vpop.xlane.xlu0 %16
    %v18 = vsub.f32 %v12, %v17
    %v19 = vmul.f32 %v18, 1.442695
    %v20 = vpow.pop %v19
    %v21 = vsel %vm14, %v20, 0.0
    %22 = vadd.xlane.f32.xlu0 %v21
    %v23 = vpop.xlane.xlu0 %22
    %v24 = vlog2.pop %v23
    %v25 = vmul.f32 %v24, 0.6931472
    %v26 = vadd.f32 %v17, %v25
    %v27 = vlaneseq
    %v28 = vand.u32 %v27, 127
    %29 = vset.pattern.permute.xlu0 0
    %30 = vperm.xlu0 %29, %v13
    %v31 = vpop.permute.xlu0 %30
    %vm32 = vcmp.eq.s32.totalorder %v28, %v31
    %v33 = vsel %vm32, 0.903125, 0.003125
    %v34 = vmul.f32 %v33, %v12
    %v35 = vsel %vm14, %v34, 0.0
    %36 = vadd.xlane.f32.xlu0 %v35
    %v37 = vpop.xlane.xlu0 %36
    %v38 = vsub.f32 %v26, %v37
    %vm39 = vcmask 7168
    %v40 = vsel %vm39, %v38, 0.0
    %41 = vadd.xlane.f32.xlu0 %v40
    %v42 = vpop.xlane.xlu0 %41
    %v43 = vrot.slane %v42, 4
    %v44 = vadd.f32 %v42, %v43
    %v45 = vrot.slane %v44, 2
    %v46 = vadd.f32 %v44, %v45
    %v47 = vrot.slane %v46, 1
    %v48 = vadd.f32 %v46, %v47
    %s49 = vtos %v48
    %s50 = smul.f32 %s49, 0.125
    %s51 = scalar_lea.smem [#allocation2], 0
    %52 = sst [smem:[%s51]] %s50
    // Predicated region
    $region10: #{tpu_custom_call.1} parent=1 // pred_check
      _
    $region11: #{tpu_custom_call.1} parent=1 // pred_check_branch
      %54 = sbr.rel (0) target = $region13
    $region12: #{tpu_custom_call.1} parent=1 // pred_region
      %56 = vsyncadd [#allocation3], 0
      %s58 = sshll.u32 %s2, 4
      %s59 = int_to_ptr.hbm [resolvable:$true] %s58
      %61 = dma.smem_to_hbm [#allocation2], 16, %s59, [#allocation3]
    $region13: #{tpu_custom_call.1} parent=1 // pred_fallthru
      _
    // Predicated region
    $region14: #{tpu_custom_call.1} parent=1 // pred_check
      _
    $region15: #{tpu_custom_call.1} parent=1 // pred_check_branch
      %63 = sbr.rel (0) target = $region17
    $region16: #{tpu_custom_call.1} parent=1 // pred_region
      %65 = dma.done [#allocation3], 16
    $region17: #{tpu_custom_call.1} parent=1 // pred_fallthru
      _
    %66 = sfence
    %67 = vsyncpa [#allocation3], 1

</llo_original>
